<compile_context>
chip_gen: v6e
topology: v6e:2x2x1
jax: 0.10.0
libtpu: 0.0.40
codegen_flags: <defaults>
</compile_context>

<pallas_src>
import functools

import jax
import jax.numpy as jnp
from jax.experimental import pallas as pl
from jax.experimental.pallas import tpu as pltpu


def _rmsnorm_kernel(x_ref, w_ref, o_ref, *, eps):
    # Square -> row-mean -> rsqrt -> scale, accumulation in f32.
    x = x_ref[...]
    xf = x.astype(jnp.float32)
    ms = jnp.mean(xf * xf, axis=-1, keepdims=True)
    normed = xf * jax.lax.rsqrt(ms + eps)
    # .type_as(x) happens before the weight multiply, as in the PyTorch module.
    o_ref[...] = (normed.astype(x.dtype) * w_ref[...]).astype(o_ref.dtype)


def _round_up(x, m):
    return ((x + m - 1) // m) * m


def _chip_params():
    """Per-generation tile / VMEM-limit selection.

    v7x-class chips (64 MiB VMEM per TC, ~3.2 TB/s HBM): bigger 4 MiB tiles
    to amortize per-step overhead, but a 48 MiB scoped-VMEM ceiling so the
    double-buffered in/out tiles plus f32 intermediates never approach the
    smaller physical VMEM. v5e/v6e (128 MiB VMEM): 2 MiB tiles already sit on
    the measured 85-86% roofline plateau; 32 MiB scoped limit is plenty.
    """
    vmem_cap = None
    try:
        info = pltpu.get_tpu_info()
        vmem_cap = getattr(info, "vmem_capacity_bytes", None)
    except Exception:
        vmem_cap = None
    if vmem_cap is not None and vmem_cap <= 64 * 1024 * 1024:
        return {"target_tile_bytes": 4 * 1024 * 1024,
                "vmem_limit_bytes": 48 * 1024 * 1024}
    return {"target_tile_bytes": 2 * 1024 * 1024,
            "vmem_limit_bytes": 32 * 1024 * 1024}


def _choose_row_block(rows, dim, in_itemsize, target_tile_bytes):
    """Pick a row tile targeting ~target_tile_bytes of input bytes per block.

    VMEM budget per tile (must stay well under the scoped limit):
      2x input tile (double-buffered) + 2x output tile (double-buffered)
      + up to ~1 full-f32 copy of the tile (xf is live across the reduce and
        the scale pass and may be materialized by the compiler)
    ~= 6-8x the input-tile bytes for bf16 in / bf16 out, so 2-4 MiB input
    tiles stay comfortably inside a 32-48 MiB scoped-VMEM budget.
    """
    if rows < 8:
        return rows  # block equals the full leading dim (allowed by layout rules)
    rb = max(8, target_tile_bytes // max(1, dim * in_itemsize))
    rb = (rb // 8) * 8                      # sublane-aligned
    if rows >= 32:
        # Keep >= ~4 grid steps so in-DMA / compute / out-DMA overlap instead
        # of serializing in a degenerate single-block grid.
        rb = min(rb, max(8, ((rows // 4) // 8) * 8))
    rb = min(rb, _round_up(rows, 8))        # don't exceed the (padded) row count
    return int(rb)


def rmsnorm(x, weight, eps=1e-6, out_dtype=None):
    """x: [..., dim]; weight: [dim]. Returns RMSNorm(x) * weight.

    out_dtype defaults to x.dtype (HBM-traffic-optimal for inference). This
    deviates from strict torch dtype promotion only when weight is wider than
    x (e.g. bf16 activations + f32 weight); pass
    out_dtype=jnp.promote_types(x.dtype, weight.dtype) for exact torch output
    dtype.
    """
    dim = x.shape[-1]
    assert weight.shape == (dim,)
    lead = x.shape[:-1]
    rows = 1
    for d in lead:
        rows *= d
    x2d = x.reshape(rows, dim)
    w2d = weight.reshape(1, dim)

    if out_dtype is None:
        out_dtype = x.dtype

    chip = _chip_params()
    row_block = _choose_row_block(
        rows, dim, jnp.dtype(x.dtype).itemsize, chip["target_tile_bytes"])
    # cdiv grid: odd row counts keep good tiles; the partial last block's
    # out-of-range rows are per-row-independent garbage and masked on store.
    grid = (pl.cdiv(rows, row_block),)

    # TODO(synk): for dim < 128 the lane dimension is under-filled (masked
    # partial stores); fold several rows into the 128-lane axis in the wrapper
    # if tiny-dim RMSNorm ever becomes a hot path. Production dims >= 1024 are
    # unaffected.
    # TODO(synk): if xprof shows exposed DMA gaps at step boundaries, sweep
    # pipeline_mode=pl.Buffered(3) on the input BlockSpec (expected <= a few %).

    kernel = functools.partial(_rmsnorm_kernel, eps=eps)
    out2d = pl.pallas_call(
        kernel,
        out_shape=jax.ShapeDtypeStruct((rows, dim), out_dtype),
        grid=grid,
        in_specs=[
            pl.BlockSpec((row_block, dim), lambda i: (i, 0)),
            pl.BlockSpec((1, dim), lambda i: (0, 0)),   # weight stays resident
        ],
        out_specs=pl.BlockSpec((row_block, dim), lambda i: (i, 0)),
        compiler_params=pltpu.CompilerParams(
            dimension_semantics=("parallel",),          # megacore-shardable rows
            vmem_limit_bytes=chip["vmem_limit_bytes"],
        ),
    )(x2d, w2d)

    return out2d.reshape(*lead, dim)


def rmsnorm_ref(x, weight, eps=1e-6):
    xf = x.astype(jnp.float32)
    normed = xf * jax.lax.rsqrt(jnp.mean(xf * xf, axis=-1, keepdims=True) + eps)
    return normed.astype(x.dtype) * weight


if __name__ == "__main__":
    key = jax.random.PRNGKey(0)

    # Shapes consistent with the module's forward: [batch, seq, dim].
    batch, seq, dim = 2, 8, 32
    x = jax.random.normal(key, (batch, seq, dim), dtype=jnp.float32)
    # Deterministic param init: nn.Parameter(torch.ones(dim))
    weight = jnp.ones((dim,), dtype=jnp.float32)

    out = rmsnorm(x, weight, eps=1e-6)
    out = jax.block_until_ready(out)
    ref = rmsnorm_ref(x, weight, eps=1e-6)
    assert out.shape == (batch, seq, dim)
    assert out.dtype == x.dtype
    assert jnp.allclose(out, ref, atol=1e-5, rtol=1e-5)

    # Non-divisible row count (masked partial block) path.
    x_odd = jax.random.normal(jax.random.PRNGKey(1), (3, 5, dim), dtype=jnp.float32)
    out_odd = jax.block_until_ready(rmsnorm(x_odd, weight, eps=1e-6))
    assert jnp.allclose(out_odd, rmsnorm_ref(x_odd, weight, eps=1e-6),
                        atol=1e-5, rtol=1e-5)

    # bf16 activations + f32 weight: default out_dtype=x.dtype (bf16) path.
    x_bf16 = jax.random.normal(jax.random.PRNGKey(2), (batch, seq, dim),
                               dtype=jnp.bfloat16)
    out_bf16 = jax.block_until_ready(rmsnorm(x_bf16, weight, eps=1e-6))
    ref_bf16 = rmsnorm_ref(x_bf16, weight, eps=1e-6).astype(jnp.bfloat16)
    assert out_bf16.dtype == jnp.bfloat16
    assert jnp.allclose(out_bf16.astype(jnp.float32),
                        ref_bf16.astype(jnp.float32), atol=2e-2, rtol=2e-2)

    print("KERNEL_OK")
</pallas_src>

<mosaic_0001>
module attributes {stable_mosaic.version = 11 : i64} {
  func.func @_rmsnorm_kernel(%arg0: i32, %arg1: memref<16x32xf32, #tpu.memory_space<vmem>>, %arg2: memref<1x32xf32, #tpu.memory_space<vmem>>, %arg3: memref<16x32xf32, #tpu.memory_space<vmem>>) attributes {dimension_semantics = [#tpu.dimension_semantics<parallel>], iteration_bounds = array<i64: 1>, scalar_prefetch = 0 : i64, scratch_operands = 0 : i64, tpu.core_type = #tpu.core_type<tc>, window_params = [{transform_indices = @transform_0, window_bounds = array<i64: 16, 32>}, {pipeline_mode = #tpu.pipeline_mode<synchronous>, transform_indices = @transform_1, window_bounds = array<i64: 1, 32>}, {transform_indices = @transform_2, window_bounds = array<i64: 16, 32>}]} {
    %c0 = arith.constant 0 : index
    %c0_0 = arith.constant 0 : index
    %0 = vector.load %arg1[%c0, %c0_0] : memref<16x32xf32, #tpu.memory_space<vmem>>, vector<16x32xf32>
    %1 = arith.mulf %0, %0 : vector<16x32xf32>
    %cst = arith.constant dense<0.000000e+00> : vector<16xf32>
    %2 = vector.multi_reduction <add>, %1, %cst [1] : vector<16x32xf32> to vector<16xf32>
    %3 = vector.shape_cast %2 : vector<16xf32> to vector<16x1xf32>
    %cst_1 = arith.constant 3.200000e+01 : f32
    %4 = vector.broadcast %cst_1 : f32 to vector<16x1xf32>
    %5 = arith.divf %3, %4 : vector<16x1xf32>
    %cst_2 = arith.constant 9.99999997E-7 : f32
    %6 = vector.broadcast %cst_2 : f32 to vector<16x1xf32>
    %7 = arith.addf %5, %6 : vector<16x1xf32>
    %8 = math.rsqrt %7 : vector<16x1xf32>
    %9 = vector.broadcast %8 : vector<16x1xf32> to vector<16x32xf32>
    %10 = arith.mulf %0, %9 : vector<16x32xf32>
    %c0_3 = arith.constant 0 : index
    %c0_4 = arith.constant 0 : index
    %11 = vector.load %arg2[%c0_3, %c0_4] : memref<1x32xf32, #tpu.memory_space<vmem>>, vector<1x32xf32>
    %12 = vector.broadcast %11 : vector<1x32xf32> to vector<16x32xf32>
    %13 = arith.mulf %10, %12 : vector<16x32xf32>
    %c0_5 = arith.constant 0 : index
    %c0_6 = arith.constant 0 : index
    %14 = vector.load %arg3[%c0_5, %c0_6] : memref<16x32xf32, #tpu.memory_space<vmem>>, vector<16x32xf32>
    tpu.vector_store %arg3[%c0_5, %c0_6], %13 {strides = array<i32>} : memref<16x32xf32, #tpu.memory_space<vmem>>, vector<16x32xf32>,
    return
  }
  func.func @transform_0(%arg0: i32) -> (i32, i32) {
    %c0_i32 = arith.constant 0 : i32
    %c0_i32_0 = arith.constant 0 : i32
    return %arg0, %c0_i32 : i32, i32
  }
  func.func @transform_1(%arg0: i32) -> (i32, i32) {
    %c0_i32 = arith.constant 0 : i32
    %c0_i32_0 = arith.constant 0 : i32
    %c0_i32_1 = arith.constant 0 : i32
    return %c0_i32, %c0_i32_0 : i32, i32
  }
  func.func @transform_2(%arg0: i32) -> (i32, i32) {
    %c0_i32 = arith.constant 0 : i32
    %c0_i32_0 = arith.constant 0 : i32
    return %arg0, %c0_i32 : i32, i32
  }
}

</mosaic_0001>

<llo_original>
// kernel: tpu_custom_call.1
$region0: #{tpu_custom_call.1}
  #allocation0 [shape = 'u32[]', space=smem, size = 0x4, offset = 0x4, fixed_abs, tag = 'smem constant byte address 0x4 - core index']
  #allocation1 [shape = 'u32[144,128]{1,0:T(1,128)}', space=vmem, size = 0x12000, scoped, tag = 'internal scratch']
  %s0 = inlined_call_operand.hbm [shape: f32[16,32], index: 0, kind: input, shape index: {}]
  %s1 = inlined_call_operand.vmem [shape: f32[1,32], index: 1, kind: input, shape index: {}]
  %s2 = inlined_call_operand.hbm [shape: f32[16,32], index: 2, kind: output, shape index: {}]
  %s3 = sld [smem:[#allocation0]]
  $region22: #{tpu_custom_call.1} parent=0
    _
  %s5 = ssub.s32 1, %s3
  %s6 = scalar_select 0, %s5, %s3
  $region1: #{tpu_custom_call.1} parent=0
    #allocation2 [shape = 'u8[8192]{0}', space=vmem, size = 0x2000, scoped, tag = 'input window, operand 0, single buffered']
    #allocation3 [shape = 's32[1]{0}', space=sflag, size = 0x4, scoped, tag = 'scoped memory for tpu_custom_call.1']
    #allocation4 [shape = 's32[1]{0}', space=sflag, size = 0x4, scoped, tag = 'scoped memory for tpu_custom_call.1']
    #allocation5 [shape = 'u8[8192]{0}', space=vmem, size = 0x2000, scoped, tag = 'output window, operand 0, single buffered']
    %7 = vsyncpa [#allocation3], 0
    %8 = vsyncpa [#allocation4], 0
    // Predicated region
    $region2: #{tpu_custom_call.1} parent=1 // pred_check
      _
    $region3: #{tpu_custom_call.1} parent=1 // pred_check_branch
      %10 = sbr.rel (0) target = $region5
    $region4: #{tpu_custom_call.1} parent=1 // pred_region
      %s12 = ssub.s32 256, 256
      %13 = vsyncadd [#allocation3], %s12
      %s14 = sshll.u32 [#allocation2], 4
      %s15 = int_to_ptr.vmem [resolvable:$true] %s14
      %20 = dma.hbm_to_vmem [thread:$0]  %s0, 256, %s15, [#allocation3], 128, 128, 8
    $region5: #{tpu_custom_call.1} parent=1 // pred_fallthru
      _
    // Predicated region
    $region6: #{tpu_custom_call.1} parent=1 // pred_check
      _
    $region7: #{tpu_custom_call.1} parent=1 // pred_check_branch
      %22 = sbr.rel (0) target = $region9
    $region8: #{tpu_custom_call.1} parent=1 // pred_region
      _
    $region9: #{tpu_custom_call.1} parent=1 // pred_fallthru
      _
    // Predicated region
    $region10: #{tpu_custom_call.1} parent=1 // pred_check
      _
    $region11: #{tpu_custom_call.1} parent=1 // pred_check_branch
      %24 = sbr.rel (0) target = $region13
    $region12: #{tpu_custom_call.1} parent=1 // pred_region
      %25 = dma.done [#allocation3], 256
    $region13: #{tpu_custom_call.1} parent=1 // pred_fallthru
      _
    %v26 = vld [vmem:[#allocation2] sm:$0xff]
    %v27 = vld [vmem:[#allocation2 + $0x8] sm:$0xff]
    %v28 = vmul.f32 %v26, %v26
    %v29 = vmul.f32 %v27, %v27
    %vm30 = vcmask 261120
    %v31 = vsel %vm30, %v28, 0.0
    %32 = vadd.xlane.f32.xlu0 %v31
    %v33 = vpop.xlane.xlu0 %32
    %v34 = vsel %vm30, %v29, 0.0
    %35 = vadd.xlane.f32.xlu0 %v34
    %v36 = vpop.xlane.xlu0 %35
    %v37 = vrcp.pop 32.0
    %v38 = vmul.f32 %v33, %v37
    %v39 = vmul.f32 %v36, %v37
    %v40 = vadd.f32 %v38, 1e-06
    %v41 = vadd.f32 %v39, 1e-06
    %v42 = vrsqrt.pop %v40
    %v43 = vrsqrt.pop %v41
    %v44 = vmul.f32 %v26, %v42
    %v45 = vmul.f32 %v27, %v43
    %v46 = vld [vmem:[%s1] sm:$0x1]
    %v48 = vlaneseq
    %v49 = vshrl.u32 %v48, 7
    %v50 = vsub.s32 0, %v49
    %v51 = vrot.slane %v46, %v50
    %v53 = vmul.f32 %v44, %v51
    %v54 = vmul.f32 %v45, %v51
    %55 = vst.msk [vmem:[#allocation5] sm:$0xff] %vm30, %v53
    %56 = vst.msk [vmem:[#allocation5 + $0x8] sm:$0xff] %vm30, %v54
    // Predicated region
    $region14: #{tpu_custom_call.1} parent=1 // pred_check
      _
    $region15: #{tpu_custom_call.1} parent=1 // pred_check_branch
      %58 = sbr.rel (0) target = $region17
    $region16: #{tpu_custom_call.1} parent=1 // pred_region
      %s60 = ssub.s32 256, 256
      %61 = vsyncadd [#allocation4], %s60
      %s62 = sshll.u32 [#allocation5], 4
      %s63 = int_to_ptr.vmem [resolvable:$true] %s62
      %68 = dma.vmem_to_hbm [thread:$0]  %s63, 256, %s2, [#allocation4], 128, 128, 8
    $region17: #{tpu_custom_call.1} parent=1 // pred_fallthru
      _
    // Predicated region
    $region18: #{tpu_custom_call.1} parent=1 // pred_check
      _
    $region19: #{tpu_custom_call.1} parent=1 // pred_check_branch
      %70 = sbr.rel (0) target = $region21
    $region20: #{tpu_custom_call.1} parent=1 // pred_region
      %71 = dma.done [#allocation4], 256
    $region21: #{tpu_custom_call.1} parent=1 // pred_fallthru
      _
    %72 = vsyncpa [#allocation3], 1
    %73 = vsyncpa [#allocation4], 1

</llo_original>
